<compile_context>
chip_gen: v7x
topology: tpu7x:2x2x1
jax: 0.10.0
libtpu: 0.0.40
codegen_flags: <defaults>
</compile_context>

<pallas_src>
import jax
import jax.numpy as jnp
from jax import lax
from jax.experimental import pallas as pl
from jax.experimental.pallas import tpu as pltpu


# --------------------------------------------------------------------------- #
# small helpers
# --------------------------------------------------------------------------- #
def _vmem_limit_bytes():
    # ~3/4 of physical VMEM: ~96 MiB on v5e/v6e (128 MiB), ~48 MiB on v7x (64 MiB).
    try:
        cap = int(pltpu.get_tpu_info().vmem_capacity_bytes)
    except Exception:
        cap = 64 * 1024 * 1024          # conservative fallback
    return max(32 * 1024 * 1024, min((cap * 3) // 4, 112 * 1024 * 1024))


def _pick_tile_m(m, cap=2048):
    """Largest multiple-of-128 divisor of m (capped); m itself if m is not 128-aligned."""
    if m % 128 != 0:
        return m    # TODO(synk): pad M to a multiple of 128 for very large, odd-shaped inputs
    t = min(m, cap)
    t -= t % 128
    while m % t:
        t -= 128
    return t


# --------------------------------------------------------------------------- #
# Kernel 1: farthest point sampling (per batch)
# --------------------------------------------------------------------------- #
def _fps_kernel(xyz_ref, nxyz_ref):
    # xyz_ref: [1, 3, N], nxyz_ref: [1, 3, S]
    xyz = xyz_ref[0, :, :]                                    # [3, N]
    n = xyz.shape[1]
    s = nxyz_ref.shape[2]

    lane = lax.broadcasted_iota(jnp.int32, (1, n), 1)         # [1, N]
    col = lax.broadcasted_iota(jnp.int32, (3, s), 1)          # [3, S]

    def body(i, carry):
        far, dist, acc = carry                                # [1,1]i32, [1,N]f32, [3,S]f32
        onehot = lane == far
        centroid = jnp.sum(jnp.where(onehot, xyz, 0.0), axis=1, keepdims=True)    # [3, 1]
        acc = jnp.where(col == i, centroid, acc)              # write column i
        diff = xyz - centroid
        d = jnp.sum(diff * diff, axis=0, keepdims=True)       # [1, N]
        dist = jnp.minimum(dist, d)
        m = jnp.max(dist, axis=1, keepdims=True)
        far = jnp.min(jnp.where(dist == m, lane, n), axis=1, keepdims=True)       # first argmax
        return far, dist, acc

    # TODO(synk): torch starts from a random point; we start from index 0.
    far0 = jnp.zeros((1, 1), jnp.int32)
    dist0 = jnp.full((1, n), 1e10, jnp.float32)
    acc0 = jnp.zeros((3, s), jnp.float32)
    _, _, acc = lax.fori_loop(0, s, body, (far0, dist0, acc0))
    nxyz_ref[0, :, :] = acc


# --------------------------------------------------------------------------- #
# Kernel 2: ball query + gather + centre-subtract + concat (per batch)
# --------------------------------------------------------------------------- #
def _make_group_kernel(nsample, radius):
    r2 = float(radius) * float(radius)

    def kernel(feat_ref, cen_cn_ref, cen_nc_ref, o_ref):
        # feat_ref   [1, F, N]   rows 0:3 = xyz, rows 3: = point features (pre-concatenated)
        # cen_cn_ref [1, 3, S],  cen_nc_ref [1, S, 3]
        # o_ref      [F, 1, nsample, S]  (full output array is [F, B, nsample, S])
        feat = feat_ref[0, :, :]                              # [F, N]
        cen_cn = cen_cn_ref[0, :, :]                          # [3, S]
        cen_nc = cen_nc_ref[0, :, :]                          # [S, 3]
        f = feat.shape[0]
        n = feat.shape[1]
        s = cen_nc.shape[0]

        # squared centre->point distances: 3 unrolled VPU passes (exactly >= 0, no clamp)
        d = jnp.zeros((s, n), jnp.float32)
        for ci in range(3):
            diff = cen_nc[:, ci:ci + 1] - feat[ci:ci + 1, :]  # [S,1] - [1,N] -> [S,N]
            d = d + diff * diff
        in_ball = d <= r2                                     # torch excludes d > r^2

        col = lax.broadcasted_iota(jnp.int32, (s, n), 1)      # [S, N]
        # centre pad: xyz rows get the centre subtracted, feature rows get 0
        cpad = jnp.concatenate(
            [cen_cn, jnp.zeros((f - 3, s), jnp.float32)], axis=0)                 # [F, S]

        # Iterative ball query: slot k takes the k-th smallest in-ball index; if the ball has
        # fewer than k+1 members, pad with the first one (torch's group_first).  O(S*N) per
        # slot -- no [N,N] rank matmul, no N^2 temporaries.
        remaining = in_ball
        sel_first = None
        for k in range(nsample):
            idx = jnp.min(jnp.where(remaining, col, n), axis=1, keepdims=True)    # [S, 1]
            found = idx < n                                                       # [S, 1]
            selk_raw = (col == idx).astype(jnp.float32)                           # one-hot/zero
            if k == 0:
                # the ball is never empty here: each centre is one of the points (d = 0 <= r^2)
                sel_first = selk_raw
            selk = jnp.where(found, selk_raw, sel_first)                          # pad w/ first
            remaining = remaining & (col != idx)
            g = lax.dot_general(feat, selk, (((1,), (1,)), ((), ())),
                                preferred_element_type=jnp.float32)               # [F, S]
            o_ref[:, 0, k, :] = g - cpad

    return kernel


# --------------------------------------------------------------------------- #
# Kernel 3: tiled 1x1 conv + BN(train) + ReLU (two passes per layer) + max over nsample
# --------------------------------------------------------------------------- #
def _mlp_stats_kernel(x_ref, w_ref, b_ref, sum_ref, sq_ref):
    # accumulate per-channel sum / sum-of-squares of h = W @ x + b over all M positions
    @pl.when(pl.program_id(0) == 0)
    def _():
        sum_ref[...] = jnp.zeros_like(sum_ref)
        sq_ref[...] = jnp.zeros_like(sq_ref)

    h = lax.dot_general(w_ref[...], x_ref[...], (((1,), (0,)), ((), ())),
                        preferred_element_type=jnp.float32) + b_ref[...]
    sum_ref[...] += jnp.sum(h, axis=1, keepdims=True)
    sq_ref[...] += jnp.sum(h * h, axis=1, keepdims=True)


def _mlp_apply_kernel(x_ref, w_ref, b_ref, o_ref):
    # BatchNorm already folded into w/b: y = relu(W' x + b')
    h = lax.dot_general(w_ref[...], x_ref[...], (((1,), (0,)), ((), ())),
                        preferred_element_type=jnp.float32) + b_ref[...]
    o_ref[...] = jnp.maximum(h, 0.0)


def _make_last_apply_pool_kernel(nsample):
    def kernel(x_ref, w_ref, b_ref, o_ref):
        # x_ref [Cin, 1, nsample, S], o_ref [1, Cout, S]; BN folded; fused max over nsample
        w = w_ref[...]
        b = b_ref[...]
        pooled = None
        for k in range(nsample):
            xk = x_ref[:, 0, k, :]                            # [Cin, S]
            hk = jnp.maximum(
                lax.dot_general(w, xk, (((1,), (0,)), ((), ())),
                                preferred_element_type=jnp.float32) + b, 0.0)
            pooled = hk if pooled is None else jnp.maximum(pooled, hk)
        o_ref[0, :, :] = pooled

    return kernel


# --------------------------------------------------------------------------- #
# Wrapper
# --------------------------------------------------------------------------- #
def set_abstraction(xyz, points, params, *, npoint, radius, nsample):
    """PointNet++ SetAbstraction forward.

    xyz:    [B, N, 3]   point coordinates
    points: [B, C, N]   point features (must not be None)
    params: list of (W [Cout, Cin], bias [Cout], gamma [Cout], beta [Cout]) per MLP layer,
            with Cin of the first layer equal to C + 3 (the module's in_channel).
    returns (new_xyz [B, npoint, 3], new_points [B, mlp[-1], npoint])
    """
    if points is None:
        # TODO(synk): points=None branch not implemented.
        raise NotImplementedError("points=None branch not implemented")

    B, N, _ = xyz.shape
    C = points.shape[1]
    F = C + 3
    num_layers = len(params)
    vmem = _vmem_limit_bytes()

    xyz_cn = jnp.transpose(xyz, (0, 2, 1)).astype(jnp.float32)             # [B, 3, N]
    feat = jnp.concatenate([xyz_cn, points.astype(jnp.float32)], axis=1)   # [B, 3+C, N]

    # ---- 1. farthest point sampling -> new_xyz_cn [B, 3, npoint] ----
    new_xyz_cn = pl.pallas_call(
        _fps_kernel,
        out_shape=jax.ShapeDtypeStruct((B, 3, npoint), jnp.float32),
        grid=(B,),
        in_specs=[pl.BlockSpec((1, 3, N), lambda b: (b, 0, 0))],
        out_specs=pl.BlockSpec((1, 3, npoint), lambda b: (b, 0, 0)),
        compiler_params=pltpu.CompilerParams(
            dimension_semantics=("parallel",), vmem_limit_bytes=vmem),
    )(xyz_cn)
    new_xyz = jnp.transpose(new_xyz_cn, (0, 2, 1))                          # [B, npoint, 3] (tiny)

    # ---- 2. ball query + gather + centre-subtract + concat ----
    # Output layout (3+C, B, nsample, npoint): stage 3 reshapes it to (3+C, M) for free, so
    # the previous full HBM round trip through a 4-D transpose of the largest tensor is gone.
    grouped = pl.pallas_call(
        _make_group_kernel(nsample, radius),
        out_shape=jax.ShapeDtypeStruct((F, B, nsample, npoint), jnp.float32),
        grid=(B,),
        in_specs=[
            pl.BlockSpec((1, F, N), lambda b: (b, 0, 0)),
            pl.BlockSpec((1, 3, npoint), lambda b: (b, 0, 0)),
            pl.BlockSpec((1, npoint, 3), lambda b: (b, 0, 0)),
        ],
        out_specs=pl.BlockSpec((F, 1, nsample, npoint), lambda b: (0, b, 0, 0)),
        compiler_params=pltpu.CompilerParams(
            dimension_semantics=("parallel",), vmem_limit_bytes=vmem),
    )(feat, new_xyz_cn, new_xyz)

    # ---- 3. MLP stack: per layer a tiled two-pass (BN stats, then folded scale/shift apply) ----
    M = B * nsample * npoint
    x = grouped.reshape(F, M)                      # free: merge of trailing contiguous dims
    tile_m = _pick_tile_m(M)
    n_tiles = M // tile_m

    new_points = None
    for li, (W, bias, gamma, beta) in enumerate(params):
        cout, cin = W.shape
        Wf = W.astype(jnp.float32)
        bf = bias.reshape(-1, 1).astype(jnp.float32)
        gf = gamma.reshape(-1, 1).astype(jnp.float32)
        btf = beta.reshape(-1, 1).astype(jnp.float32)

        # pass 1: per-channel batch statistics of h = W x + b over all M positions
        s_sum, s_sq = pl.pallas_call(
            _mlp_stats_kernel,
            out_shape=(jax.ShapeDtypeStruct((cout, 1), jnp.float32),
                       jax.ShapeDtypeStruct((cout, 1), jnp.float32)),
            grid=(n_tiles,),
            in_specs=[pl.BlockSpec((cin, tile_m), lambda i: (0, i)),
                      pl.BlockSpec((cout, cin), lambda i: (0, 0)),
                      pl.BlockSpec((cout, 1), lambda i: (0, 0))],
            out_specs=(pl.BlockSpec((cout, 1), lambda i: (0, 0)),
                       pl.BlockSpec((cout, 1), lambda i: (0, 0))),
            compiler_params=pltpu.CompilerParams(
                dimension_semantics=("arbitrary",), vmem_limit_bytes=vmem),
        )(x, Wf, bf)

        # fold BatchNorm (training stats, biased var, eps=1e-5) into one scale/shift
        # TODO(synk): running_mean/running_var updates (eval mode) not implemented.
        mean = s_sum / M
        var = jnp.maximum(s_sq / M - mean * mean, 0.0)
        a = gf * lax.rsqrt(var + 1e-5)             # [cout, 1]
        w_fold = a * Wf                            # [cout, cin]
        b_fold = a * (bf - mean) + btf             # [cout, 1]

        if li < num_layers - 1:
            # pass 2: y = relu(W' x + b'), tiled over M, parallel grid (dual-TC on v7x)
            x = pl.pallas_call(
                _mlp_apply_kernel,
                out_shape=jax.ShapeDtypeStruct((cout, M), jnp.float32),
                grid=(n_tiles,),
                in_specs=[pl.BlockSpec((cin, tile_m), lambda i: (0, i)),
                          pl.BlockSpec((cout, cin), lambda i: (0, 0)),
                          pl.BlockSpec((cout, 1), lambda i: (0, 0))],
                out_specs=pl.BlockSpec((cout, tile_m), lambda i: (0, i)),
                compiler_params=pltpu.CompilerParams(
                    dimension_semantics=("parallel",), vmem_limit_bytes=vmem),
            )(x, w_fold, b_fold)
        else:
            # last layer: fuse the max-pool over nsample; emit directly as [B, Cout, npoint]
            x4 = x.reshape(cin, B, nsample, npoint)    # free view of the same buffer
            new_points = pl.pallas_call(
                _make_last_apply_pool_kernel(nsample),
                out_shape=jax.ShapeDtypeStruct((B, cout, npoint), jnp.float32),
                grid=(B,),
                in_specs=[pl.BlockSpec((cin, 1, nsample, npoint), lambda b: (0, b, 0, 0)),
                          pl.BlockSpec((cout, cin), lambda b: (0, 0)),
                          pl.BlockSpec((cout, 1), lambda b: (0, 0))],
                out_specs=pl.BlockSpec((1, cout, npoint), lambda b: (b, 0, 0)),
                compiler_params=pltpu.CompilerParams(
                    dimension_semantics=("parallel",), vmem_limit_bytes=vmem),
            )(x4, w_fold, b_fold)

    return new_xyz, new_points


# --------------------------------------------------------------------------- #
# pure-JAX reference (mirrors kernel semantics: FPS start index 0, BN training stats)
# --------------------------------------------------------------------------- #
def _reference_forward(xyz, points, params, npoint, radius, nsample):
    B, N, _ = xyz.shape
    xyz = xyz.astype(jnp.float32)
    pts_nc = jnp.transpose(points.astype(jnp.float32), (0, 2, 1))           # [B, N, C]

    fps_idx = []
    for b in range(B):
        xb = xyz[b]
        dist = jnp.full((N,), 1e10, jnp.float32)
        far = 0
        idxs = []
        for _ in range(npoint):
            idxs.append(far)
            cen = xb[far]
            d = jnp.sum((xb - cen) ** 2, axis=-1)
            dist = jnp.minimum(dist, d)
            far = int(jnp.argmax(dist))
        fps_idx.append(idxs)
    fps_idx = jnp.array(fps_idx, jnp.int32)                                 # [B, S]
    new_xyz = xyz[jnp.arange(B)[:, None], fps_idx]                          # [B, S, 3]

    d2 = jnp.sum((new_xyz[:, :, None, :] - xyz[:, None, :, :]) ** 2, axis=-1)   # [B, S, N]
    gi = jnp.where(d2 > radius ** 2, N, jnp.arange(N)[None, None, :])
    gi = jnp.sort(gi, axis=-1)[:, :, :nsample]
    gfirst = gi[:, :, 0:1]
    gi = jnp.where(gi == N, gfirst, gi)                                     # [B, S, K]

    bidx3 = jnp.arange(B)[:, None, None]
    grouped_xyz = xyz[bidx3, gi] - new_xyz[:, :, None, :]                   # [B, S, K, 3]
    grouped_pts = pts_nc[bidx3, gi]                                         # [B, S, K, C]
    h = jnp.concatenate([grouped_xyz, grouped_pts], axis=-1)                # [B, S, K, 3+C]
    h = jnp.transpose(h, (0, 3, 1, 2))                                      # [B, 3+C, S, K]

    for (W, bias, gamma, beta) in params:
        h = jnp.einsum('oc,bcsk->bosk', W.astype(jnp.float32), h) \
            + bias.astype(jnp.float32)[None, :, None, None]
        mean = jnp.mean(h, axis=(0, 2, 3), keepdims=True)
        var = jnp.mean((h - mean) ** 2, axis=(0, 2, 3), keepdims=True)
        h = (h - mean) / jnp.sqrt(var + 1e-5)
        h = jnp.maximum(gamma.astype(jnp.float32)[None, :, None, None] * h
                        + beta.astype(jnp.float32)[None, :, None, None], 0.0)
    return new_xyz, jnp.max(h, axis=-1)                                     # [B, Cout, S]


if __name__ == "__main__":
    key = jax.random.PRNGKey(0)

    B, N = 2, 32                 # batch, number of input points
    C = 4                        # input point-feature channels
    npoint, radius, nsample = 8, 1.5, 8
    mlp = [32, 64]
    in_channel = C + 3           # matches SetAbstraction(..., in_channel=C+3, mlp=[32, 64])

    ks = jax.random.split(key, 2 + 4 * len(mlp))
    xyz = jax.random.normal(ks[0], (B, N, 3), jnp.float32)
    points = jax.random.normal(ks[1], (B, C, N), jnp.float32)

    # synthetic Conv2d(k=1) weight [Cout, Cin], bias, BN gamma/beta per layer
    params = []
    last = in_channel
    ki = 2
    for c_out in mlp:
        W = 0.1 * jax.random.normal(ks[ki], (c_out, last), jnp.float32); ki += 1
        b = 0.05 * jax.random.normal(ks[ki], (c_out,), jnp.float32); ki += 1
        g = 1.0 + 0.1 * jax.random.normal(ks[ki], (c_out,), jnp.float32); ki += 1
        bt = 0.1 * jax.random.normal(ks[ki], (c_out,), jnp.float32); ki += 1
        params.append((W, b, g, bt))
        last = c_out

    new_xyz, new_points = set_abstraction(
        xyz, points, params, npoint=npoint, radius=radius, nsample=nsample)
    jax.block_until_ready((new_xyz, new_points))

    assert new_xyz.shape == (B, npoint, 3) and new_xyz.dtype == jnp.float32
    assert new_points.shape == (B, mlp[-1], npoint) and new_points.dtype == jnp.float32
    assert bool(jnp.all(jnp.isfinite(new_xyz))) and bool(jnp.all(jnp.isfinite(new_points)))

    # correctness check against a pure-JAX reference with identical semantics
    ref_xyz, ref_points = _reference_forward(xyz, points, params, npoint, radius, nsample)
    assert bool(jnp.allclose(new_xyz, ref_xyz, atol=1e-5, rtol=1e-5)), "new_xyz mismatch"
    assert bool(jnp.allclose(new_points, ref_points, atol=5e-3, rtol=5e-3)), "new_points mismatch"

    print("KERNEL_OK")
</pallas_src>

<mosaic_0001>
module attributes {stable_mosaic.version = 11 : i64} {
  func.func @_fps_kernel(%arg0: i32, %arg1: memref<1x3x32xf32, #tpu.memory_space<vmem>>, %arg2: memref<1x3x8xf32, #tpu.memory_space<vmem>>) attributes {dimension_semantics = [#tpu.dimension_semantics<parallel>], iteration_bounds = array<i64: 2>, scalar_prefetch = 0 : i64, scratch_operands = 0 : i64, tpu.core_type = #tpu.core_type<tc>, window_params = [{transform_indices = @transform_0, window_bounds = array<i64: 1, 3, 32>}, {transform_indices = @transform_1, window_bounds = array<i64: 1, 3, 8>}]} {
    %c0 = arith.constant 0 : index
    %c0_0 = arith.constant 0 : index
    %c0_1 = arith.constant 0 : index
    %0 = vector.load %arg1[%c0, %c0_0, %c0_1] : memref<1x3x32xf32, #tpu.memory_space<vmem>>, vector<1x3x32xf32>
    %1 = vector.shape_cast %0 : vector<1x3x32xf32> to vector<3x32xf32>
    %2 = tpu.iota {dimensions = array<i32: 1>} : vector<1x32xi32>
    %3 = tpu.iota {dimensions = array<i32: 1>} : vector<3x8xi32>
    %c0_i32 = arith.constant 0 : i32
    %4 = vector.broadcast %c0_i32 : i32 to vector<1x1xi32>
    %cst = arith.constant 1.000000e+10 : f32
    %5 = vector.broadcast %cst : f32 to vector<1x32xf32>
    %cst_2 = arith.constant 0.000000e+00 : f32
    %6 = vector.broadcast %cst_2 : f32 to vector<3x8xf32>
    %c0_i32_3 = arith.constant 0 : i32
    %c8_i32 = arith.constant 8 : i32
    %7 = arith.addi %c0_i32_3, %c8_i32 : i32
    %c1_i32 = arith.constant 1 : i32
    %8:3 = scf.for %arg3 = %c0_i32_3 to %7 step %c1_i32 iter_args(%arg4 = %4, %arg5 = %5, %arg6 = %6) -> (vector<1x1xi32>, vector<1x32xf32>, vector<3x8xf32>)  : i32 {
      %12 = vector.broadcast %arg4 : vector<1x1xi32> to vector<1x32xi32>
      %13 = arith.cmpi eq, %2, %12 : vector<1x32xi32>
      %cst_8 = arith.constant 0.000000e+00 : f32
      %14 = vector.shape_cast %13 : vector<1x32xi1> to vector<1x32xi1>
      %15 = vector.broadcast %14 : vector<1x32xi1> to vector<3x32xi1>
      %16 = vector.broadcast %cst_8 : f32 to vector<3x32xf32>
      %17 = arith.select %15, %1, %16 : vector<3x32xi1>, vector<3x32xf32>
      %cst_9 = arith.constant dense<0.000000e+00> : vector<3xf32>
      %18 = vector.multi_reduction <add>, %17, %cst_9 [1] : vector<3x32xf32> to vector<3xf32>
      %19 = vector.shape_cast %18 : vector<3xf32> to vector<3x1xf32>
      %20 = vector.broadcast %arg3 : i32 to vector<3x8xi32>
      %21 = arith.cmpi eq, %3, %20 : vector<3x8xi32>
      %22 = vector.shape_cast %19 : vector<3x1xf32> to vector<3x1xf32>
      %23 = vector.broadcast %22 : vector<3x1xf32> to vector<3x8xf32>
      %24 = arith.select %21, %23, %arg6 : vector<3x8xi1>, vector<3x8xf32>
      %25 = vector.broadcast %19 : vector<3x1xf32> to vector<3x32xf32>
      %26 = arith.subf %1, %25 : vector<3x32xf32>
      %27 = arith.mulf %26, %26 : vector<3x32xf32>
      %cst_10 = arith.constant dense<0.000000e+00> : vector<32xf32>
      %28 = vector.multi_reduction <add>, %27, %cst_10 [0] : vector<3x32xf32> to vector<32xf32>
      %29 = vector.shape_cast %28 : vector<32xf32> to vector<1x32xf32>
      %30 = arith.minimumf %arg5, %29 : vector<1x32xf32>
      %cst_11 = arith.constant dense<0xFF800000> : vector<1xf32>
      %31 = vector.multi_reduction <maximumf>, %30, %cst_11 [1] : vector<1x32xf32> to vector<1xf32>
      %32 = vector.shape_cast %31 : vector<1xf32> to vector<1x1xf32>
      %33 = vector.broadcast %32 : vector<1x1xf32> to vector<1x32xf32>
      %34 = arith.cmpf oeq, %30, %33 : vector<1x32xf32>
      %c32_i32 = arith.constant 32 : i32
      %35 = vector.broadcast %c32_i32 : i32 to vector<1x32xi32>
      %36 = arith.select %34, %2, %35 : vector<1x32xi1>, vector<1x32xi32>
      %cst_12 = arith.constant dense<2147483647> : vector<1xi32>
      %37 = vector.multi_reduction <minsi>, %36, %cst_12 [1] : vector<1x32xi32> to vector<1xi32>
      %38 = vector.shape_cast %37 : vector<1xi32> to vector<1x1xi32>
      scf.yield %38, %30, %24 : vector<1x1xi32>, vector<1x32xf32>, vector<3x8xf32>
    }
    %c8_i32_4 = arith.constant 8 : i32
    %c0_5 = arith.constant 0 : index
    %c0_6 = arith.constant 0 : index
    %c0_7 = arith.constant 0 : index
    %9 = vector.load %arg2[%c0_5, %c0_6, %c0_7] : memref<1x3x8xf32, #tpu.memory_space<vmem>>, vector<1x3x8xf32>
    %10 = vector.shape_cast %9 : vector<1x3x8xf32> to vector<3x8xf32>
    %11 = vector.shape_cast %8#2 : vector<3x8xf32> to vector<1x3x8xf32>
    tpu.vector_store %arg2[%c0_5, %c0_6, %c0_7], %11 {strides = array<i32>} : memref<1x3x8xf32, #tpu.memory_space<vmem>>, vector<1x3x8xf32>,
    return
  }
  func.func @transform_0(%arg0: i32) -> (i32, i32, i32) {
    %c0_i32 = arith.constant 0 : i32
    %c0_i32_0 = arith.constant 0 : i32
    %c0_i32_1 = arith.constant 0 : i32
    return %arg0, %c0_i32, %c0_i32_0 : i32, i32, i32
  }
  func.func @transform_1(%arg0: i32) -> (i32, i32, i32) {
    %c0_i32 = arith.constant 0 : i32
    %c0_i32_0 = arith.constant 0 : i32
    %c0_i32_1 = arith.constant 0 : i32
    return %arg0, %c0_i32, %c0_i32_0 : i32, i32, i32
  }
}

</mosaic_0001>

<llo_original>
// kernel: tpu_custom_call.1
$region0: #{tpu_custom_call.1}
  #allocation0 [shape = 'u32[]', space=smem, size = 0x4, offset = 0x4, fixed_abs, tag = 'smem constant byte address 0x4 - core index']
  #allocation1 [shape = 'u32[144,128]{1,0:T(1,128)}', space=vmem, size = 0x12000, scoped, tag = 'internal scratch']
  %s0 = inlined_call_operand.vmem [shape: f32[2,3,32], index: 0, kind: input, shape index: {}]
  %s1 = inlined_call_operand.vmem [shape: f32[2,3,8], index: 1, kind: output, shape index: {}]
  %s2 = sld [smem:[#allocation0]]
  $region44: #{tpu_custom_call.1} parent=0
    _
  %s4 = ssub.s32 1, %s2
  %s5 = scalar_select 0, %s4, %s2
  loop: start=0, step=1, limit=4
  $region2: #{tpu_custom_call.1} parent=0 // loop_pre_header
    _
  $region3: #{tpu_custom_call.1} parent=0 // loop_header
    %s7 = sphi 0, %s11
    %p8 = scmp.ge.s32.totalorder %s7, 4
    %s17 = sphi 0, %s19
    %s20 = sphi 0, %s17
    %s21 = sphi 0, %s20
    %s37 = sphi 0, %s21
    %s43 = sphi 0, %s45
    %s46 = sphi 0, %s43
    %s47 = sphi 0, %s46
    %s63 = sphi 0, %s47
  $region4: #{tpu_custom_call.1} parent=0 // loop_header_branch
    %10 = sbr.rel (%p8) target = $region8
  $region5: #{tpu_custom_call.1} parent=0 // loop_body
    %s12 = ssub.s32 %s7, 1
    %s13 = ssub.s32 %s7, 2
    %s14 = sadd.s32 %s7, 1
    %s15 = ssub.s32 %s7, %s14
    %p16 = scmp.eq.s32.totalorder %s15, 0
    %s18 = sadd.s32 %s17, 1
    %s19 = scalar_select %p16, %s17, %s18
    %p22 = pneg %p16
    %p23 = scmp.eq.s32.totalorder %s7, 1
    %p24 = por %p22, %p23
    %p25 = scmp.ne.s32.totalorder %s17, %s20
    %p26 = scmp.eq.s32.totalorder %s7, 0
    %p27 = por %p25, %p26
    %p28 = scmp.ne.s32.totalorder %s17, %s20
    %p29 = scmp.eq.s32.totalorder %s12, 1
    %p30 = por %p28, %p29
    %p31 = scmp.ne.s32.totalorder %s20, %s21
    %p32 = scmp.eq.s32.totalorder %s12, 0
    %p33 = por %p31, %p32
    %p34 = scmp.ne.s32.totalorder %s20, %s21
    %p35 = scmp.eq.s32.totalorder %s13, 1
    %p36 = por %p34, %p35
    %p38 = scmp.ne.s32.totalorder %s21, %s37
    %p39 = scmp.eq.s32.totalorder %s13, 0
    %p40 = por %p38, %p39
    %s41 = ssub.s32 %s7, %s14
    %p42 = scmp.eq.s32.totalorder %s41, 0
    %s44 = sadd.s32 %s43, 1
    %s45 = scalar_select %p42, %s43, %s44
    %p48 = pneg %p42
    %p49 = scmp.eq.s32.totalorder %s7, 1
    %p50 = por %p48, %p49
    %p51 = scmp.ne.s32.totalorder %s43, %s46
    %p52 = scmp.eq.s32.totalorder %s7, 0
    %p53 = por %p51, %p52
    %p54 = scmp.ne.s32.totalorder %s43, %s46
    %p55 = scmp.eq.s32.totalorder %s12, 1
    %p56 = por %p54, %p55
    %p57 = scmp.ne.s32.totalorder %s46, %s47
    %p58 = scmp.eq.s32.totalorder %s12, 0
    %p59 = por %p57, %p58
    %p60 = scmp.ne.s32.totalorder %s46, %s47
    %p61 = scmp.eq.s32.totalorder %s13, 1
    %p62 = por %p60, %p61
    %p64 = scmp.ne.s32.totalorder %s47, %s63
    %p65 = scmp.eq.s32.totalorder %s13, 0
    %p66 = por %p64, %p65
    %p67 = scmp.le.s32.totalorder 1, %s7
    %p68 = scmp.lt.s32.totalorder %s7, 3
    %p69 = pnand %p67, %p68
    %p70 = pneg %p69
    // Predicated region
    $region9: #{tpu_custom_call.1} parent=5 // pred_check
      _
    $region10: #{tpu_custom_call.1} parent=5 // pred_check_branch
      %72 = sbr.rel (%p69) target = $region12
    $region11: #{tpu_custom_call.1} parent=5 // pred_region
      %s73 = ssub.s32 %s7, 1
    $region12: #{tpu_custom_call.1} parent=5 // pred_fallthru
      _
    %p74 = scmp.lt.s32.totalorder %s7, 2
    // Predicated region
    $region13: #{tpu_custom_call.1} parent=5 // pred_check
      %p75 = pneg %p74
    $region14: #{tpu_custom_call.1} parent=5 // pred_check_branch
      %77 = sbr.rel (%p75) target = $region16
    $region15: #{tpu_custom_call.1} parent=5 // pred_region
      // Predicated region
      $region17: #{tpu_custom_call.1} parent=15 // pred_check
        %p78 = pneg %p27
      $region18: #{tpu_custom_call.1} parent=15 // pred_check_branch
        %80 = sbr.rel (%p78) target = $region20
      $region19: #{tpu_custom_call.1} parent=15 // pred_region
        %p81 = scmp.lt.s32.totalorder %s7, 1
        %s82 = scalar_select %p81, %s7, 1
        %s83 = smul.addr %s82, 4
        %s84 = scalar_lea.vmem %s0, %s83
      $region20: #{tpu_custom_call.1} parent=15 // pred_fallthru
        _
    $region16: #{tpu_custom_call.1} parent=5 // pred_fallthru
      _
    %p85 = scmp.le.s32.totalorder 1, %s7
    %p86 = scmp.lt.s32.totalorder %s7, 3
    %p87 = pnand %p85, %p86
    %p88 = pneg %p87
    // Predicated region
    $region21: #{tpu_custom_call.1} parent=5 // pred_check
      _
    $region22: #{tpu_custom_call.1} parent=5 // pred_check_branch
      %90 = sbr.rel (%p87) target = $region24
    $region23: #{tpu_custom_call.1} parent=5 // pred_region
      %s91 = ssub.s32 %s7, 1
      %p92 = scmp.lt.s32.totalorder %s12, 1
      %s93 = scalar_select %p92, %s12, 1
      %s94 = smul.addr %s93, 4
      %s95 = scalar_lea.vmem %s0, %s94
      %p96 = pneg %p33
      %p97 = pneg %p30
      %p98 = pneg %p59
      %p99 = pneg %p56
      %p100 = scmp.lt.s32.totalorder %s12, 1
      %s101 = scalar_select %p100, %s12, 1
      %s102 = smul.addr %s101, 4
      %s103 = scalar_lea.vmem %s1, %s102
      %p104 = scmp.lt.s32.totalorder %s12, 1
      %s105 = scalar_select %p104, %s12, 1
      %s106 = smul.addr %s105, 4
      %s107 = scalar_lea.vmem %s0, %s106
      %p108 = scmp.lt.s32.totalorder %s12, 1
      %s109 = scalar_select %p108, %s12, 1
      %s110 = smul.addr %s109, 4
      %s111 = scalar_lea.vmem %s1, %s110
      %v112 = vld [vmem:[%s107] sm:$0x7]
      %v113 = vlaneseq
      %v114 = vand.u32 %v113, 127
      loop: start=0, step=1, limit=8
      $region25: #{tpu_custom_call.1} parent=23 // loop_pre_header
        _
      $region26: #{tpu_custom_call.1} parent=23 // loop_header
        %s116 = sphi 0, %s120
        %p117 = scmp.ge.s32.totalorder %s116, 8
        %v121 = vphi 0, %v165
        %v122 = vphi 1e+10, %v144
        %v123 = vphi 0.0, %v134
      $region27: #{tpu_custom_call.1} parent=23 // loop_header_branch
        %119 = sbr.rel (%p117) target = $region31
      $region28: #{tpu_custom_call.1} parent=23 // loop_body
        %vm124 = vcmp.eq.s32.totalorder %v114, %v121
        %v125 = vsel %vm124, 1, 0
        %vm126 = vcmp.eq.s32.totalorder %v125, 1
        %v127 = vsel %vm126, %v112, 0.0
        %vm128 = vcmask 256000
        %v129 = vsel %vm128, %v127, 0.0
        %130 = vadd.xlane.f32.xlu0 %v129
        %v131 = vpop.xlane.xlu0 %130
        %v132 = vstv %s116
        %vm133 = vcmp.eq.s32.totalorder %v114, %v132
        %v134 = vsel %vm133, %v131, %v123
        %v135 = vsub.f32 %v112, %v131
        %v136 = vmul.f32 %v135, %v135
        %v137 = vsel %vm128, %v136, 0.0
        %v138 = vrot.slane %v137, 4
        %v139 = vadd.f32 %v137, %v138
        %v140 = vrot.slane %v139, 2
        %v141 = vadd.f32 %v139, %v140
        %v142 = vrot.slane %v141, 1
        %v143 = vadd.f32 %v141, %v142
        %v144 = vmin.f32 %v122, %v143
        %vm145 = vcmask 261120
        %v146 = vsel %vm145, %v144, -inf
        %147 = vmax.xlane.f32.xlu0 %v146
        %v148 = vpop.xlane.xlu0 %147
        %vm149 = vcmp.eq.f32.partialorder %v144, %v148
        %v150 = vsel %vm149, %v114, 32
        %v151 = vsel %vm145, %v150, 2147483647
        %v152 = vand.u32 %v151, 65535
        %v153 = vshra.s32 %v151, 16
        %v154 = vcvt.s32.f32 %v152
        %v155 = vcvt.s32.f32 %v153
        %156 = vmin.xlane.f32.xlu0 %v155
        %v157 = vpop.xlane.xlu0 %156
        %vm158 = vcmp.eq.f32.partialorder %v155, %v157
        %v159 = vsel %vm158, %v154, inf
        %160 = vmin.xlane.f32.xlu0 %v159
        %v161 = vpop.xlane.xlu0 %160
        %v162 = vcvt.f32.s32 %v161
        %v163 = vcvt.f32.s32 %v157
        %v164 = vshll.u32 %v163, 16
        %v165 = vadd.s32 %v164, %v162
      $region29: #{tpu_custom_call.1} parent=23 // loop_footer
        %s120 = sadd.s32 1, %s116
      $region30: #{tpu_custom_call.1} parent=23 // loop_footer_branch
        %115 = sbr.rel target = $region26
      $region31: #{tpu_custom_call.1} parent=23 // loop_exit
        _
      %vm166 = vcmask 59392
      %167 = vst.msk [vmem:[%s111] sm:$0x7] %vm166, %v123
      %p168 = scmp.lt.s32.totalorder %s12, 1
      %s169 = scalar_select %p168, %s12, 1
      %s170 = smul.addr %s169, 4
      %s171 = scalar_lea.vmem %s1, %s170
      // Predicated region
      $region32: #{tpu_custom_call.1} parent=23 // pred_check
        %p172 = pneg %p56
      $region33: #{tpu_custom_call.1} parent=23 // pred_check_branch
        %174 = sbr.rel (%p172) target = $region35
      $region34: #{tpu_custom_call.1} parent=23 // pred_region
        _
      $region35: #{tpu_custom_call.1} parent=23 // pred_fallthru
        _
    $region24: #{tpu_custom_call.1} parent=5 // pred_fallthru
      _
    %p175 = scmp.le.s32.totalorder 2, %s7
    // Predicated region
    $region36: #{tpu_custom_call.1} parent=5 // pred_check
      %p176 = pneg %p175
    $region37: #{tpu_custom_call.1} parent=5 // pred_check_branch
      %178 = sbr.rel (%p176) target = $region39
    $region38: #{tpu_custom_call.1} parent=5 // pred_region
      %s179 = ssub.s32 %s7, 2
      // Predicated region
      $region40: #{tpu_custom_call.1} parent=38 // pred_check
        %p180 = pneg %p62
      $region41: #{tpu_custom_call.1} parent=38 // pred_check_branch
        %182 = sbr.rel (%p180) target = $region43
      $region42: #{tpu_custom_call.1} parent=38 // pred_region
        %p183 = scmp.lt.s32.totalorder %s13, 1
        %s184 = scalar_select %p183, %s13, 1
        %s185 = smul.addr %s184, 4
        %s186 = scalar_lea.vmem %s1, %s185
      $region43: #{tpu_custom_call.1} parent=38 // pred_fallthru
        _
    $region39: #{tpu_custom_call.1} parent=5 // pred_fallthru
      _
  $region6: #{tpu_custom_call.1} parent=0 // loop_footer
    %s11 = sadd.s32 1, %s7
  $region7: #{tpu_custom_call.1} parent=0 // loop_footer_branch
    %6 = sbr.rel target = $region3
  $region8: #{tpu_custom_call.1} parent=0 // loop_exit
    _

</llo_original>
